<compile_context>
chip_gen: v6e
topology: v6e:2x2x1
jax: 0.10.0
libtpu: 0.0.40
codegen_flags: <defaults>
</compile_context>

<pallas_src>
import jax
import jax.numpy as jnp
from jax.experimental import pallas as pl
from jax.experimental.pallas import tpu as pltpu


def linear_relu_kernel(x_ref, wt_ref, b_ref, o_ref):
    # x_ref: (tm, K), wt_ref: (K, N) [MXU-native, pre-transposed at init],
    # b_ref: (1, N), o_ref: (tm, N)
    acc = jnp.dot(x_ref[...], wt_ref[...], preferred_element_type=jnp.float32)
    acc = acc + b_ref[...]                      # broadcast bias over rows (VPU)
    o_ref[...] = jnp.maximum(acc, 0.0).astype(o_ref.dtype)


def _cost(M, N, K):
    # Advisory hint for XLA's scheduler around the custom call.
    return pl.CostEstimate(
        flops=2 * M * N * K,
        bytes_accessed=4 * (M * K + K * N + N + M * N),
        transcendentals=0,
    )


# Row tile used only on the batched (large-M) path; multiple of 8 (f32 sublane).
_TM = 128


@jax.jit
def linear_relu(x, weight_t, bias2d):
    """y = relu(x @ weight_t + bias); weight_t is the (K, N) pre-transposed weight."""
    M, K = x.shape
    K2, N = weight_t.shape
    assert K == K2

    if M % _TM == 0 and M > _TM:
        # Batched/amortized path: grid over M, both TCs busy on v7x.
        return pl.pallas_call(
            linear_relu_kernel,
            out_shape=jax.ShapeDtypeStruct((M, N), x.dtype),
            grid_spec=pltpu.PrefetchScalarGridSpec(
                num_scalar_prefetch=0,
                grid=(M // _TM,),
                in_specs=[
                    pl.BlockSpec((_TM, K), lambda i: (i, 0)),
                    pl.BlockSpec((K, N), lambda i: (0, 0)),
                    pl.BlockSpec((1, N), lambda i: (0, 0)),
                ],
                out_specs=pl.BlockSpec((_TM, N), lambda i: (i, 0)),
            ),
            compiler_params=pltpu.CompilerParams(
                dimension_semantics=("parallel",)),
            cost_estimate=_cost(M, N, K),
        )(x, weight_t, bias2d)

    # Small-M path (the spec's (3, 40) input): gridless, everything resident in
    # VMEM, single kernel body — no pipelining/double-buffer bookkeeping.
    return pl.pallas_call(
        linear_relu_kernel,
        out_shape=jax.ShapeDtypeStruct((M, N), x.dtype),
        in_specs=[
            pl.BlockSpec(memory_space=pltpu.MemorySpace.VMEM),
            pl.BlockSpec(memory_space=pltpu.MemorySpace.VMEM),
            pl.BlockSpec(memory_space=pltpu.MemorySpace.VMEM),
        ],
        out_specs=pl.BlockSpec(memory_space=pltpu.MemorySpace.VMEM),
        cost_estimate=_cost(M, N, K),
    )(x, weight_t, bias2d)


if __name__ == "__main__":
    key = jax.random.PRNGKey(0)
    kx, kw, kb, kx2 = jax.random.split(key, 4)

    # Deterministic synthetic parameters matching nn.Linear(40, 16)
    in_features, out_features = 40, 16
    bound = 1.0 / (in_features ** 0.5)
    weight = jax.random.uniform(
        kw, (out_features, in_features), jnp.float32, -bound, bound)  # PyTorch (N, K)
    bias = jax.random.uniform(
        kb, (out_features,), jnp.float32, -bound, bound)

    # One-time parameter preparation (done at setup, NOT per call):
    weight_t = jnp.asarray(weight.T)            # (K, N) MXU-native layout
    bias2d = bias.reshape(1, out_features)      # 2-D for clean TPU layout

    # 1) Spec input: x1 = torch.randn(3, 40)
    x1 = jax.random.normal(kx, (3, in_features), jnp.float32)
    out = jax.block_until_ready(linear_relu(x1, weight_t, bias2d))
    ref = jnp.maximum(x1 @ weight.T + bias, 0.0)
    assert out.shape == (3, out_features)
    assert jnp.allclose(out, ref, atol=1e-5, rtol=1e-5)

    # 2) Amortized path check: many (3, 40) activations stacked along M
    #    (M multiple of 8 and of the row tile) — exercises the gridded,
    #    megacore-parallel variant the review asked for.
    xb = jax.random.normal(kx2, (512, in_features), jnp.float32)
    outb = jax.block_until_ready(linear_relu(xb, weight_t, bias2d))
    refb = jnp.maximum(xb @ weight.T + bias, 0.0)
    assert outb.shape == (512, out_features)
    assert jnp.allclose(outb, refb, atol=1e-5, rtol=1e-5)

    print("KERNEL_OK")
</pallas_src>

<mosaic_0001>
module attributes {stable_mosaic.version = 11 : i64} {
  func.func @linear_relu_kernel(%arg0: memref<3x40xf32, #tpu.memory_space<vmem>>, %arg1: memref<40x16xf32, #tpu.memory_space<vmem>>, %arg2: memref<1x16xf32, #tpu.memory_space<vmem>>, %arg3: memref<3x16xf32, #tpu.memory_space<vmem>>) attributes {dimension_semantics = [], scalar_prefetch = 0 : i64, scratch_operands = 0 : i64, tpu.core_type = #tpu.core_type<tc>} {
    %c0 = arith.constant 0 : index
    %c0_0 = arith.constant 0 : index
    %0 = vector.load %arg0[%c0, %c0_0] : memref<3x40xf32, #tpu.memory_space<vmem>>, vector<3x40xf32>
    %c0_1 = arith.constant 0 : index
    %c0_2 = arith.constant 0 : index
    %1 = vector.load %arg1[%c0_1, %c0_2] : memref<40x16xf32, #tpu.memory_space<vmem>>, vector<40x16xf32>
    %cst = arith.constant dense<0.000000e+00> : vector<3x16xf32>
    %2 = tpu.matmul %0, %1, %cst {dimension_numbers = #tpu.dot_dimension_numbers<[1], [0], [0], [1], [0, 0, 1, 1], [], []>} : vector<3x40xf32>, vector<40x16xf32>, vector<3x16xf32> -> vector<3x16xf32>
    %c0_3 = arith.constant 0 : index
    %c0_4 = arith.constant 0 : index
    %3 = vector.load %arg2[%c0_3, %c0_4] : memref<1x16xf32, #tpu.memory_space<vmem>>, vector<1x16xf32>
    %4 = vector.broadcast %3 : vector<1x16xf32> to vector<3x16xf32>
    %5 = arith.addf %2, %4 : vector<3x16xf32>
    %cst_5 = arith.constant 0.000000e+00 : f32
    %6 = vector.broadcast %cst_5 : f32 to vector<3x16xf32>
    %7 = arith.maximumf %5, %6 : vector<3x16xf32>
    %c0_6 = arith.constant 0 : index
    %c0_7 = arith.constant 0 : index
    %8 = vector.load %arg3[%c0_6, %c0_7] : memref<3x16xf32, #tpu.memory_space<vmem>>, vector<3x16xf32>
    tpu.vector_store %arg3[%c0_6, %c0_7], %7 {strides = array<i32>} : memref<3x16xf32, #tpu.memory_space<vmem>>, vector<3x16xf32>,
    return
  }
}

</mosaic_0001>

<llo_original>
// kernel: linear_relu.1
$region0: #{linear_relu.1}
  #allocation0 [shape = 'u32[]', space=smem, size = 0x4, offset = 0x4, fixed_abs, tag = 'smem constant byte address 0x4 - core index']
  #allocation1 [shape = 'u32[144,128]{1,0:T(1,128)}', space=vmem, size = 0x12000, scoped, tag = 'internal scratch']
  %s0 = inlined_call_operand.vmem [shape: f32[3,40], index: 0, kind: input, shape index: {}]
  %s1 = inlined_call_operand.vmem [shape: f32[40,16], index: 1, kind: input, shape index: {}]
  %s2 = inlined_call_operand.vmem [shape: f32[1,16], index: 2, kind: input, shape index: {}]
  %s3 = inlined_call_operand.hbm [shape: f32[3,16], index: 3, kind: output, shape index: {}]
  %s4 = sld [smem:[#allocation0]]
  $region22: #{linear_relu.1} parent=0
    _
  %s6 = ssub.s32 1, %s4
  %s7 = scalar_select 0, %s6, %s4
  $region1: #{linear_relu.1} parent=0
    #allocation2 [shape = 'u8[2048]{0}', space=vmem, size = 0x800, scoped, tag = 'output window, operand 0, single buffered']
    #allocation3 [shape = 's32[1]{0}', space=sflag, size = 0x4, scoped, tag = 'scoped memory for linear_relu.1']
    %8 = vsyncpa [#allocation3], 0
    // Predicated region
    $region2: #{linear_relu.1} parent=1 // pred_check
      _
    $region3: #{linear_relu.1} parent=1 // pred_check_branch
      %10 = sbr.rel (0) target = $region5
    $region4: #{linear_relu.1} parent=1 // pred_region
      _
    $region5: #{linear_relu.1} parent=1 // pred_fallthru
      _
    // Predicated region
    $region6: #{linear_relu.1} parent=1 // pred_check
      _
    $region7: #{linear_relu.1} parent=1 // pred_check_branch
      %12 = sbr.rel (0) target = $region9
    $region8: #{linear_relu.1} parent=1 // pred_region
      _
    $region9: #{linear_relu.1} parent=1 // pred_fallthru
      _
    // Predicated region
    $region10: #{linear_relu.1} parent=1 // pred_check
      _
    $region11: #{linear_relu.1} parent=1 // pred_check_branch
      %14 = sbr.rel (0) target = $region13
    $region12: #{linear_relu.1} parent=1 // pred_region
      _
    $region13: #{linear_relu.1} parent=1 // pred_fallthru
      _
    %v15 = vld [vmem:[%s0] sm:$0x7]
    %v16 = vld [vmem:[%s1] sm:$0xff]
    %v17 = vld [vmem:[%s1 + $0x8] sm:$0xff]
    %v18 = vld [vmem:[%s1 + $0x10] sm:$0xff]
    %v19 = vld [vmem:[%s1 + $0x18] sm:$0xff]
    %v20 = vld [vmem:[%s1 + $0x20] sm:$0xff]
    %v21 = vld [vmem:[%s2] sm:$0x1]
    %v23 = vlaneseq
    %v24 = vshrl.u32 %v23, 7
    %v25 = vsub.s32 0, %v24
    %v26 = vrot.slane %v21, %v25
    %vm28 = vcmask 326656
    %v30 = vsel %vm28, %v15, 0
    %32 = vmatprep.subr.mxu0 0.0
    %33 = vmatpush1.msra.mxu0 0.0
    %34 = vmatprep.subr.mxu0 0.0
    %35 = vmatpush1.msra.mxu0 0.0
    %36 = vmatprep.subr.mxu0 0.0
    %37 = vmatpush1.msra.mxu0 0.0
    %38 = vmatprep.subr.mxu0 0.0
    %39 = vmatpush1.msra.mxu0 0.0
    %40 = vmatprep.subr.mxu0 0.0
    %41 = vmatpush1.msra.mxu0 0.0
    %42 = vmatprep.subr.mxu0 0.0
    %43 = vmatpush1.msra.mxu0 0.0
    %44 = vmatprep.subr.mxu0 0.0
    %45 = vmatpush1.msra.mxu0 0.0
    %46 = vmatprep.subr.mxu0 0.0
    %47 = vmatpush1.msra.mxu0 0.0
    %48 = vmatprep.subr.mxu0 0.0
    %49 = vmatpush1.msra.mxu0 0.0
    %50 = vmatprep.subr.mxu0 0.0
    %51 = vmatpush1.msra.mxu0 0.0
    %52 = vmatprep.subr.mxu0 0.0
    %53 = vmatpush1.msra.mxu0 0.0
    %54 = vmatprep.subr.mxu0 0.0
    %55 = vmatpush1.msra.mxu0 %v20
    %56 = vmatprep.subr.mxu0 0.0
    %57 = vmatpush1.msra.mxu0 %v19
    %58 = vmatprep.subr.mxu0 0.0
    %59 = vmatpush1.msra.mxu0 %v18
    %60 = vmatprep.subr.mxu0 0.0
    %61 = vmatpush1.msra.mxu0 %v17
    %62 = vmatprep.subr.mxu0 0.0
    %63 = vmatpush1.msra.mxu0 %v16
    %64 = vmatprep.subr.mxu0 0.0
    %65 = vmatpush2.msra.mxu0 0.0
    %66 = vmatprep.subr.mxu0 0.0
    %67 = vmatpush2.msra.mxu0 0.0
    %68 = vmatprep.subr.mxu0 0.0
    %69 = vmatpush2.msra.mxu0 0.0
    %70 = vmatprep.subr.mxu0 0.0
    %71 = vmatpush2.msra.mxu0 0.0
    %72 = vmatprep.subr.mxu0 0.0
    %73 = vmatpush2.msra.mxu0 0.0
    %74 = vmatprep.subr.mxu0 0.0
    %75 = vmatpush2.msra.mxu0 0.0
    %76 = vmatprep.subr.mxu0 0.0
    %77 = vmatpush2.msra.mxu0 0.0
    %78 = vmatprep.subr.mxu0 0.0
    %79 = vmatpush2.msra.mxu0 0.0
    %80 = vmatprep.subr.mxu0 0.0
    %81 = vmatpush2.msra.mxu0 0.0
    %82 = vmatprep.subr.mxu0 0.0
    %83 = vmatpush2.msra.mxu0 0.0
    %84 = vmatprep.subr.mxu0 0.0
    %85 = vmatpush2.msra.mxu0 0.0
    %86 = vmatprep.subr.mxu0 0.0
    %87 = vmatpush2.msra.mxu0 0.0
    %88 = vmatprep.subr.mxu0 0.0
    %89 = vmatpush2.msra.mxu0 0.0
    %90 = vmatprep.subr.mxu0 0.0
    %91 = vmatpush2.msra.mxu0 0.0
    %92 = vmatprep.subr.mxu0 0.0
    %93 = vmatpush2.msra.mxu0 0.0
    %94 = vmatprep.subr.mxu0 0.0
    %95 = vmatpush2.msra.mxu0 0.0
    %96 = vmatprep.mubr.f32.mxu0 0.0
    %97 = vmatmul.mubr.f32.gmra.mxu0 %v30
    %v98 = vpop.f32.mrf.mxu0
    %v99 = vadd.f32 %v26, %v98
    %v100 = vpop.f32.mrf.mxu0
    %101 = vdwg.mxu0
    %v102 = vmax.f32 %v99, 0.0
    %vm103 = vcmask 124928
    %104 = vst.msk [vmem:[#allocation2] sm:$0x7] %vm103, %v102
    // Predicated region
    $region14: #{linear_relu.1} parent=1 // pred_check
      _
    $region15: #{linear_relu.1} parent=1 // pred_check_branch
      %106 = sbr.rel (0) target = $region17
    $region16: #{linear_relu.1} parent=1 // pred_region
      %s108 = ssub.s32 64, 64
      %109 = vsyncadd [#allocation3], %s108
      %s111 = sshll.u32 [#allocation2], 4
      %s112 = int_to_ptr.vmem [resolvable:$true] %s111
      %114 = dma.vmem_to_hbm [thread:$0]  %s112, 64, %s3, [#allocation3]
    $region17: #{linear_relu.1} parent=1 // pred_fallthru
      _
    // Predicated region
    $region18: #{linear_relu.1} parent=1 // pred_check
      _
    $region19: #{linear_relu.1} parent=1 // pred_check_branch
      %116 = sbr.rel (0) target = $region21
    $region20: #{linear_relu.1} parent=1 // pred_region
      %117 = dma.done [#allocation3], 64
    $region21: #{linear_relu.1} parent=1 // pred_fallthru
      _
    %118 = vsyncpa [#allocation3], 1

</llo_original>
